<compile_context>
chip_gen: v7x
topology: tpu7x:2x2x1
jax: 0.10.0
libtpu: 0.0.40
codegen_flags: <defaults>
</compile_context>

<pallas_src>
import functools

import jax
import jax.numpy as jnp
from jax import lax
from jax.experimental import pallas as pl
from jax.experimental.pallas import tpu as pltpu


def _lstm_ocr_kernel(x_ref, wih_ref, whh_ref, b_ref, wout_ref, bout_ref,
                     o_ref, seq_sc):
    """Single-batch LSTM recurrence + Linear + log_softmax, fully in VMEM.

    x_ref    : (T, D)      input sequence
    wih_ref  : (D, 4H)     W_ih^T   (PyTorch gate order i, f, g, o)
    whh_ref  : (H, 4H)     W_hh^T
    b_ref    : (1, 4H)     b_ih + b_hh
    wout_ref : (Hp, Vp)    hidden2out weight^T, zero-padded to lane width
    bout_ref : (1, Vp)     hidden2out bias, -1e30 in padded vocab lanes
    o_ref    : (T, Vp)     log-probs (padded lanes are junk; wrapper slices)
    seq_sc   : (T, Hp)     collected lstm_out, lane-padded with zeros
    """
    T = x_ref.shape[0]
    H = whh_ref.shape[0]

    # Hoisted input projection + bias: one (T, D) @ (D, 4H) matmul, removed
    # from the serial per-step dependence chain.
    gates_x = (jnp.dot(x_ref[...], wih_ref[...],
                       preferred_element_type=jnp.float32) + b_ref[...])

    whh = whh_ref[...]                      # hoist recurrent weight load

    # Zero the padded scratch once so padded lanes contribute nothing to the
    # output projection.
    seq_sc[...] = jnp.zeros_like(seq_sc)

    # Fully-unrolled recurrence; h / c stay in vregs, one masked store of h
    # per step is the only VMEM traffic inside the loop.
    h = jnp.zeros((1, H), jnp.float32)
    c = jnp.zeros((1, H), jnp.float32)
    for t in range(T):
        gates = gates_x[t:t + 1, :] + jnp.dot(
            h, whh, preferred_element_type=jnp.float32)          # (1, 4H)
        i_g = jax.nn.sigmoid(gates[:, 0 * H:1 * H])
        f_g = jax.nn.sigmoid(gates[:, 1 * H:2 * H])
        g_g = jnp.tanh(gates[:, 2 * H:3 * H])
        o_g = jax.nn.sigmoid(gates[:, 3 * H:4 * H])
        c = f_g * c + i_g * g_g
        h = o_g * jnp.tanh(c)
        seq_sc[t:t + 1, 0:H] = h

    # Lane-dense output projection (T, Hp) @ (Hp, Vp) + stable log-softmax.
    # Padded vocab lanes carry bias -1e30 -> exp underflows to 0, so the
    # normalizer only sees the real V logits.
    logits = (jnp.dot(seq_sc[...], wout_ref[...],
                      preferred_element_type=jnp.float32) + bout_ref[...])
    m = jnp.max(logits, axis=-1, keepdims=True)
    lse = m + jnp.log(jnp.sum(jnp.exp(logits - m), axis=-1, keepdims=True))
    o_ref[...] = logits - lse


@functools.partial(jax.jit, static_argnames=("hidden_dim",))
def lstm_ocr_forward(inputs, w_ih, w_hh, b_ih, b_hh, w_out, b_out, *, hidden_dim):
    """inputs: (T, 1, D) float32; returns (T, V) log-probs (matches PyTorch LSTMOCR)."""
    T, B, D = inputs.shape
    assert B == 1, "original module only shape-checks with batch == 1"
    H = hidden_dim
    V = w_out.shape[0]

    LANES = 128
    Hp = LANES * pl.cdiv(H, LANES)          # lane-pad hidden for the projection
    Vp = LANES * pl.cdiv(V, LANES)          # lane-pad vocab for a dense output

    x = inputs.reshape(T, D).astype(jnp.float32)
    wih_t = w_ih.T.astype(jnp.float32)                     # (D, 4H)
    whh_t = w_hh.T.astype(jnp.float32)                     # (H, 4H)
    b = (b_ih + b_hh).reshape(1, 4 * H).astype(jnp.float32)

    # hidden2out weight^T, zero-padded rows/cols; padded vocab lanes get a very
    # negative bias so they drop out of the log-softmax normalizer.
    wout_p = jnp.zeros((Hp, Vp), jnp.float32).at[:H, :V].set(
        w_out.T.astype(jnp.float32))
    bout_p = jnp.full((1, Vp), -1e30, jnp.float32).at[0, :V].set(
        b_out.astype(jnp.float32))

    # TODO(synk): for large T, tile the sequence with a grid axis ("arbitrary")
    # carrying h/c across tiles, and cast weights to bf16 for the MXU; kept
    # whole-array f32 here to match the 1e-4 reference tolerance at toy shapes.
    vmem = pl.BlockSpec(memory_space=pltpu.MemorySpace.VMEM)
    out_p = pl.pallas_call(
        _lstm_ocr_kernel,
        out_shape=jax.ShapeDtypeStruct((T, Vp), jnp.float32),
        in_specs=[vmem] * 6,
        out_specs=vmem,
        scratch_shapes=[
            pltpu.VMEM((T, Hp), jnp.float32),   # lane-padded lstm_out
        ],
    )(x, wih_t, whh_t, b, wout_p, bout_p)

    return out_p[:, :V]


def _reference_forward(inputs, w_ih, w_hh, b_ih, b_hh, w_out, b_out, hidden_dim):
    """Pure-JAX reference mirroring PyTorch semantics (for verification)."""
    T, B, D = inputs.shape
    H = hidden_dim
    x = inputs.reshape(T, D)

    def step(carry, x_t):
        h, c = carry
        gates = x_t @ w_ih.T + b_ih + h @ w_hh.T + b_hh
        i = jax.nn.sigmoid(gates[0 * H:1 * H])
        f = jax.nn.sigmoid(gates[1 * H:2 * H])
        g = jnp.tanh(gates[2 * H:3 * H])
        o = jax.nn.sigmoid(gates[3 * H:4 * H])
        c = f * c + i * g
        h = o * jnp.tanh(c)
        return (h, c), h

    (_, _), hs = lax.scan(step, (jnp.zeros(H), jnp.zeros(H)), x)
    logits = hs @ w_out.T + b_out
    return jax.nn.log_softmax(logits, axis=1)


if __name__ == "__main__":
    # Small shapes implied by the module: seq-first LSTM input, batch=1.
    T, D, H, V = 8, 16, 32, 40

    key = jax.random.PRNGKey(0)
    ks = jax.random.split(key, 7)
    k_lstm = 1.0 / jnp.sqrt(H)
    k_lin = 1.0 / jnp.sqrt(H)

    # Deterministic synthetic parameters (shapes match nn.LSTM / nn.Linear).
    w_ih = jax.random.uniform(ks[0], (4 * H, D), minval=-k_lstm, maxval=k_lstm)
    w_hh = jax.random.uniform(ks[1], (4 * H, H), minval=-k_lstm, maxval=k_lstm)
    b_ih = jax.random.uniform(ks[2], (4 * H,), minval=-k_lstm, maxval=k_lstm)
    b_hh = jax.random.uniform(ks[3], (4 * H,), minval=-k_lstm, maxval=k_lstm)
    w_out = jax.random.uniform(ks[4], (V, H), minval=-k_lin, maxval=k_lin)
    b_out = jax.random.uniform(ks[5], (V,), minval=-k_lin, maxval=k_lin)

    inputs = jax.random.normal(ks[6], (T, 1, D), dtype=jnp.float32)

    out = lstm_ocr_forward(inputs, w_ih, w_hh, b_ih, b_hh, w_out, b_out,
                           hidden_dim=H)
    out = jax.block_until_ready(out)

    ref = _reference_forward(inputs, w_ih, w_hh, b_ih, b_hh, w_out, b_out, H)
    assert out.shape == (T, V)
    assert jnp.allclose(out, ref, atol=1e-4, rtol=1e-4), "mismatch vs reference"

    print("KERNEL_OK")
</pallas_src>

<mosaic_0001>
module attributes {stable_mosaic.version = 11 : i64} {
  func.func @_lstm_ocr_kernel(%arg0: memref<8x16xf32, #tpu.memory_space<vmem>>, %arg1: memref<16x128xf32, #tpu.memory_space<vmem>>, %arg2: memref<32x128xf32, #tpu.memory_space<vmem>>, %arg3: memref<1x128xf32, #tpu.memory_space<vmem>>, %arg4: memref<128x128xf32, #tpu.memory_space<vmem>>, %arg5: memref<1x128xf32, #tpu.memory_space<vmem>>, %arg6: memref<8x128xf32, #tpu.memory_space<vmem>>, %arg7: memref<8x128xf32, #tpu.memory_space<vmem>>) attributes {dimension_semantics = [], scalar_prefetch = 0 : i64, scratch_operands = 1 : i64, tpu.core_type = #tpu.core_type<tc>} {
    %c0 = arith.constant 0 : index
    %c0_0 = arith.constant 0 : index
    %0 = vector.load %arg0[%c0, %c0_0] : memref<8x16xf32, #tpu.memory_space<vmem>>, vector<8x16xf32>
    %c0_1 = arith.constant 0 : index
    %c0_2 = arith.constant 0 : index
    %1 = vector.load %arg1[%c0_1, %c0_2] : memref<16x128xf32, #tpu.memory_space<vmem>>, vector<16x128xf32>
    %cst = arith.constant dense<0.000000e+00> : vector<8x128xf32>
    %2 = tpu.matmul %0, %1, %cst {dimension_numbers = #tpu.dot_dimension_numbers<[1], [0], [0], [1], [0, 0, 1, 1], [], []>} : vector<8x16xf32>, vector<16x128xf32>, vector<8x128xf32> -> vector<8x128xf32>
    %c0_3 = arith.constant 0 : index
    %c0_4 = arith.constant 0 : index
    %3 = vector.load %arg3[%c0_3, %c0_4] : memref<1x128xf32, #tpu.memory_space<vmem>>, vector<1x128xf32>
    %4 = vector.broadcast %3 : vector<1x128xf32> to vector<8x128xf32>
    %5 = arith.addf %2, %4 : vector<8x128xf32>
    %c0_5 = arith.constant 0 : index
    %c0_6 = arith.constant 0 : index
    %6 = vector.load %arg2[%c0_5, %c0_6] : memref<32x128xf32, #tpu.memory_space<vmem>>, vector<32x128xf32>
    %cst_7 = arith.constant 0.000000e+00 : f32
    %7 = vector.broadcast %cst_7 : f32 to vector<8x128xf32>
    %c0_8 = arith.constant 0 : index
    %c0_9 = arith.constant 0 : index
    %8 = vector.load %arg7[%c0_8, %c0_9] : memref<8x128xf32, #tpu.memory_space<vmem>>, vector<8x128xf32>
    tpu.vector_store %arg7[%c0_8, %c0_9], %7 {strides = array<i32>} : memref<8x128xf32, #tpu.memory_space<vmem>>, vector<8x128xf32>,
    %cst_10 = arith.constant 0.000000e+00 : f32
    %9 = vector.broadcast %cst_10 : f32 to vector<1x32xf32>
    %cst_11 = arith.constant 0.000000e+00 : f32
    %10 = vector.broadcast %cst_11 : f32 to vector<1x32xf32>
    %11 = vector.extract_strided_slice %5 {offsets = [0, 0], sizes = [1, 128], strides = [1, 1]} : vector<8x128xf32> to vector<1x128xf32>
    %cst_12 = arith.constant dense<0.000000e+00> : vector<1x128xf32>
    %12 = tpu.matmul %9, %6, %cst_12 {dimension_numbers = #tpu.dot_dimension_numbers<[1], [0], [0], [1], [0, 0, 1, 1], [], []>} : vector<1x32xf32>, vector<32x128xf32>, vector<1x128xf32> -> vector<1x128xf32>
    %13 = arith.addf %11, %12 : vector<1x128xf32>
    %14 = vector.extract_strided_slice %13 {offsets = [0, 0], sizes = [1, 32], strides = [1, 1]} : vector<1x128xf32> to vector<1x32xf32>
    %15 = arith.negf %14 : vector<1x32xf32>
    %16 = math.exp %15 : vector<1x32xf32>
    %cst_13 = arith.constant 1.000000e+00 : f32
    %17 = vector.broadcast %cst_13 : f32 to vector<1x32xf32>
    %18 = arith.addf %17, %16 : vector<1x32xf32>
    %19 = arith.divf %17, %18 : vector<1x32xf32>
    %20 = vector.extract_strided_slice %13 {offsets = [0, 32], sizes = [1, 32], strides = [1, 1]} : vector<1x128xf32> to vector<1x32xf32>
    %21 = arith.negf %20 : vector<1x32xf32>
    %22 = math.exp %21 : vector<1x32xf32>
    %cst_14 = arith.constant 1.000000e+00 : f32
    %23 = vector.broadcast %cst_14 : f32 to vector<1x32xf32>
    %24 = arith.addf %23, %22 : vector<1x32xf32>
    %25 = arith.divf %23, %24 : vector<1x32xf32>
    %26 = vector.extract_strided_slice %13 {offsets = [0, 64], sizes = [1, 32], strides = [1, 1]} : vector<1x128xf32> to vector<1x32xf32>
    %27 = math.tanh %26 : vector<1x32xf32>
    %28 = vector.extract_strided_slice %13 {offsets = [0, 96], sizes = [1, 32], strides = [1, 1]} : vector<1x128xf32> to vector<1x32xf32>
    %29 = arith.negf %28 : vector<1x32xf32>
    %30 = math.exp %29 : vector<1x32xf32>
    %cst_15 = arith.constant 1.000000e+00 : f32
    %31 = vector.broadcast %cst_15 : f32 to vector<1x32xf32>
    %32 = arith.addf %31, %30 : vector<1x32xf32>
    %33 = arith.divf %31, %32 : vector<1x32xf32>
    %34 = arith.mulf %25, %10 : vector<1x32xf32>
    %35 = arith.mulf %19, %27 : vector<1x32xf32>
    %36 = arith.addf %34, %35 : vector<1x32xf32>
    %37 = math.tanh %36 : vector<1x32xf32>
    %38 = arith.mulf %33, %37 : vector<1x32xf32>
    %c0_16 = arith.constant 0 : index
    %c0_17 = arith.constant 0 : index
    %39 = vector.load %arg7[%c0_16, %c0_17] : memref<8x128xf32, #tpu.memory_space<vmem>>, vector<1x32xf32>
    tpu.vector_store %arg7[%c0_16, %c0_17], %38 {strides = array<i32>} : memref<8x128xf32, #tpu.memory_space<vmem>>, vector<1x32xf32>,
    %40 = vector.extract_strided_slice %5 {offsets = [1, 0], sizes = [1, 128], strides = [1, 1]} : vector<8x128xf32> to vector<1x128xf32>
    %cst_18 = arith.constant dense<0.000000e+00> : vector<1x128xf32>
    %41 = tpu.matmul %38, %6, %cst_18 {dimension_numbers = #tpu.dot_dimension_numbers<[1], [0], [0], [1], [0, 0, 1, 1], [], []>} : vector<1x32xf32>, vector<32x128xf32>, vector<1x128xf32> -> vector<1x128xf32>
    %42 = arith.addf %40, %41 : vector<1x128xf32>
    %43 = vector.extract_strided_slice %42 {offsets = [0, 0], sizes = [1, 32], strides = [1, 1]} : vector<1x128xf32> to vector<1x32xf32>
    %44 = arith.negf %43 : vector<1x32xf32>
    %45 = math.exp %44 : vector<1x32xf32>
    %cst_19 = arith.constant 1.000000e+00 : f32
    %46 = vector.broadcast %cst_19 : f32 to vector<1x32xf32>
    %47 = arith.addf %46, %45 : vector<1x32xf32>
    %48 = arith.divf %46, %47 : vector<1x32xf32>
    %49 = vector.extract_strided_slice %42 {offsets = [0, 32], sizes = [1, 32], strides = [1, 1]} : vector<1x128xf32> to vector<1x32xf32>
    %50 = arith.negf %49 : vector<1x32xf32>
    %51 = math.exp %50 : vector<1x32xf32>
    %cst_20 = arith.constant 1.000000e+00 : f32
    %52 = vector.broadcast %cst_20 : f32 to vector<1x32xf32>
    %53 = arith.addf %52, %51 : vector<1x32xf32>
    %54 = arith.divf %52, %53 : vector<1x32xf32>
    %55 = vector.extract_strided_slice %42 {offsets = [0, 64], sizes = [1, 32], strides = [1, 1]} : vector<1x128xf32> to vector<1x32xf32>
    %56 = math.tanh %55 : vector<1x32xf32>
    %57 = vector.extract_strided_slice %42 {offsets = [0, 96], sizes = [1, 32], strides = [1, 1]} : vector<1x128xf32> to vector<1x32xf32>
    %58 = arith.negf %57 : vector<1x32xf32>
    %59 = math.exp %58 : vector<1x32xf32>
    %cst_21 = arith.constant 1.000000e+00 : f32
    %60 = vector.broadcast %cst_21 : f32 to vector<1x32xf32>
    %61 = arith.addf %60, %59 : vector<1x32xf32>
    %62 = arith.divf %60, %61 : vector<1x32xf32>
    %63 = arith.mulf %54, %36 : vector<1x32xf32>
    %64 = arith.mulf %48, %56 : vector<1x32xf32>
    %65 = arith.addf %63, %64 : vector<1x32xf32>
    %66 = math.tanh %65 : vector<1x32xf32>
    %67 = arith.mulf %62, %66 : vector<1x32xf32>
    %c1 = arith.constant 1 : index
    %c0_22 = arith.constant 0 : index
    %68 = vector.load %arg7[%c1, %c0_22] : memref<8x128xf32, #tpu.memory_space<vmem>>, vector<1x32xf32>
    tpu.vector_store %arg7[%c1, %c0_22], %67 {strides = array<i32>} : memref<8x128xf32, #tpu.memory_space<vmem>>, vector<1x32xf32>,
    %69 = vector.extract_strided_slice %5 {offsets = [2, 0], sizes = [1, 128], strides = [1, 1]} : vector<8x128xf32> to vector<1x128xf32>
    %cst_23 = arith.constant dense<0.000000e+00> : vector<1x128xf32>
    %70 = tpu.matmul %67, %6, %cst_23 {dimension_numbers = #tpu.dot_dimension_numbers<[1], [0], [0], [1], [0, 0, 1, 1], [], []>} : vector<1x32xf32>, vector<32x128xf32>, vector<1x128xf32> -> vector<1x128xf32>
    %71 = arith.addf %69, %70 : vector<1x128xf32>
    %72 = vector.extract_strided_slice %71 {offsets = [0, 0], sizes = [1, 32], strides = [1, 1]} : vector<1x128xf32> to vector<1x32xf32>
    %73 = arith.negf %72 : vector<1x32xf32>
    %74 = math.exp %73 : vector<1x32xf32>
    %cst_24 = arith.constant 1.000000e+00 : f32
    %75 = vector.broadcast %cst_24 : f32 to vector<1x32xf32>
    %76 = arith.addf %75, %74 : vector<1x32xf32>
    %77 = arith.divf %75, %76 : vector<1x32xf32>
    %78 = vector.extract_strided_slice %71 {offsets = [0, 32], sizes = [1, 32], strides = [1, 1]} : vector<1x128xf32> to vector<1x32xf32>
    %79 = arith.negf %78 : vector<1x32xf32>
    %80 = math.exp %79 : vector<1x32xf32>
    %cst_25 = arith.constant 1.000000e+00 : f32
    %81 = vector.broadcast %cst_25 : f32 to vector<1x32xf32>
    %82 = arith.addf %81, %80 : vector<1x32xf32>
    %83 = arith.divf %81, %82 : vector<1x32xf32>
    %84 = vector.extract_strided_slice %71 {offsets = [0, 64], sizes = [1, 32], strides = [1, 1]} : vector<1x128xf32> to vector<1x32xf32>
    %85 = math.tanh %84 : vector<1x32xf32>
    %86 = vector.extract_strided_slice %71 {offsets = [0, 96], sizes = [1, 32], strides = [1, 1]} : vector<1x128xf32> to vector<1x32xf32>
    %87 = arith.negf %86 : vector<1x32xf32>
    %88 = math.exp %87 : vector<1x32xf32>
    %cst_26 = arith.constant 1.000000e+00 : f32
    %89 = vector.broadcast %cst_26 : f32 to vector<1x32xf32>
    %90 = arith.addf %89, %88 : vector<1x32xf32>
    %91 = arith.divf %89, %90 : vector<1x32xf32>
    %92 = arith.mulf %83, %65 : vector<1x32xf32>
    %93 = arith.mulf %77, %85 : vector<1x32xf32>
    %94 = arith.addf %92, %93 : vector<1x32xf32>
    %95 = math.tanh %94 : vector<1x32xf32>
    %96 = arith.mulf %91, %95 : vector<1x32xf32>
    %c2 = arith.constant 2 : index
    %c0_27 = arith.constant 0 : index
    %97 = vector.load %arg7[%c2, %c0_27] : memref<8x128xf32, #tpu.memory_space<vmem>>, vector<1x32xf32>
    tpu.vector_store %arg7[%c2, %c0_27], %96 {strides = array<i32>} : memref<8x128xf32, #tpu.memory_space<vmem>>, vector<1x32xf32>,
    %98 = vector.extract_strided_slice %5 {offsets = [3, 0], sizes = [1, 128], strides = [1, 1]} : vector<8x128xf32> to vector<1x128xf32>
    %cst_28 = arith.constant dense<0.000000e+00> : vector<1x128xf32>
    %99 = tpu.matmul %96, %6, %cst_28 {dimension_numbers = #tpu.dot_dimension_numbers<[1], [0], [0], [1], [0, 0, 1, 1], [], []>} : vector<1x32xf32>, vector<32x128xf32>, vector<1x128xf32> -> vector<1x128xf32>
    %100 = arith.addf %98, %99 : vector<1x128xf32>
    %101 = vector.extract_strided_slice %100 {offsets = [0, 0], sizes = [1, 32], strides = [1, 1]} : vector<1x128xf32> to vector<1x32xf32>
    %102 = arith.negf %101 : vector<1x32xf32>
    %103 = math.exp %102 : vector<1x32xf32>
    %cst_29 = arith.constant 1.000000e+00 : f32
    %104 = vector.broadcast %cst_29 : f32 to vector<1x32xf32>
    %105 = arith.addf %104, %103 : vector<1x32xf32>
    %106 = arith.divf %104, %105 : vector<1x32xf32>
    %107 = vector.extract_strided_slice %100 {offsets = [0, 32], sizes = [1, 32], strides = [1, 1]} : vector<1x128xf32> to vector<1x32xf32>
    %108 = arith.negf %107 : vector<1x32xf32>
    %109 = math.exp %108 : vector<1x32xf32>
    %cst_30 = arith.constant 1.000000e+00 : f32
    %110 = vector.broadcast %cst_30 : f32 to vector<1x32xf32>
    %111 = arith.addf %110, %109 : vector<1x32xf32>
    %112 = arith.divf %110, %111 : vector<1x32xf32>
    %113 = vector.extract_strided_slice %100 {offsets = [0, 64], sizes = [1, 32], strides = [1, 1]} : vector<1x128xf32> to vector<1x32xf32>
    %114 = math.tanh %113 : vector<1x32xf32>
    %115 = vector.extract_strided_slice %100 {offsets = [0, 96], sizes = [1, 32], strides = [1, 1]} : vector<1x128xf32> to vector<1x32xf32>
    %116 = arith.negf %115 : vector<1x32xf32>
    %117 = math.exp %116 : vector<1x32xf32>
    %cst_31 = arith.constant 1.000000e+00 : f32
    %118 = vector.broadcast %cst_31 : f32 to vector<1x32xf32>
    %119 = arith.addf %118, %117 : vector<1x32xf32>
    %120 = arith.divf %118, %119 : vector<1x32xf32>
    %121 = arith.mulf %112, %94 : vector<1x32xf32>
    %122 = arith.mulf %106, %114 : vector<1x32xf32>
    %123 = arith.addf %121, %122 : vector<1x32xf32>
    %124 = math.tanh %123 : vector<1x32xf32>
    %125 = arith.mulf %120, %124 : vector<1x32xf32>
    %c3 = arith.constant 3 : index
    %c0_32 = arith.constant 0 : index
    %126 = vector.load %arg7[%c3, %c0_32] : memref<8x128xf32, #tpu.memory_space<vmem>>, vector<1x32xf32>
    tpu.vector_store %arg7[%c3, %c0_32], %125 {strides = array<i32>} : memref<8x128xf32, #tpu.memory_space<vmem>>, vector<1x32xf32>,
    %127 = vector.extract_strided_slice %5 {offsets = [4, 0], sizes = [1, 128], strides = [1, 1]} : vector<8x128xf32> to vector<1x128xf32>
    %cst_33 = arith.constant dense<0.000000e+00> : vector<1x128xf32>
    %128 = tpu.matmul %125, %6, %cst_33 {dimension_numbers = #tpu.dot_dimension_numbers<[1], [0], [0], [1], [0, 0, 1, 1], [], []>} : vector<1x32xf32>, vector<32x128xf32>, vector<1x128xf32> -> vector<1x128xf32>
    %129 = arith.addf %127, %128 : vector<1x128xf32>
    %130 = vector.extract_strided_slice %129 {offsets = [0, 0], sizes = [1, 32], strides = [1, 1]} : vector<1x128xf32> to vector<1x32xf32>
    %131 = arith.negf %130 : vector<1x32xf32>
    %132 = math.exp %131 : vector<1x32xf32>
    %cst_34 = arith.constant 1.000000e+00 : f32
    %133 = vector.broadcast %cst_34 : f32 to vector<1x32xf32>
    %134 = arith.addf %133, %132 : vector<1x32xf32>
    %135 = arith.divf %133, %134 : vector<1x32xf32>
    %136 = vector.extract_strided_slice %129 {offsets = [0, 32], sizes = [1, 32], strides = [1, 1]} : vector<1x128xf32> to vector<1x32xf32>
    %137 = arith.negf %136 : vector<1x32xf32>
    %138 = math.exp %137 : vector<1x32xf32>
    %cst_35 = arith.constant 1.000000e+00 : f32
    %139 = vector.broadcast %cst_35 : f32 to vector<1x32xf32>
    %140 = arith.addf %139, %138 : vector<1x32xf32>
    %141 = arith.divf %139, %140 : vector<1x32xf32>
    %142 = vector.extract_strided_slice %129 {offsets = [0, 64], sizes = [1, 32], strides = [1, 1]} : vector<1x128xf32> to vector<1x32xf32>
    %143 = math.tanh %142 : vector<1x32xf32>
    %144 = vector.extract_strided_slice %129 {offsets = [0, 96], sizes = [1, 32], strides = [1, 1]} : vector<1x128xf32> to vector<1x32xf32>
    %145 = arith.negf %144 : vector<1x32xf32>
    %146 = math.exp %145 : vector<1x32xf32>
    %cst_36 = arith.constant 1.000000e+00 : f32
    %147 = vector.broadcast %cst_36 : f32 to vector<1x32xf32>
    %148 = arith.addf %147, %146 : vector<1x32xf32>
    %149 = arith.divf %147, %148 : vector<1x32xf32>
    %150 = arith.mulf %141, %123 : vector<1x32xf32>
    %151 = arith.mulf %135, %143 : vector<1x32xf32>
    %152 = arith.addf %150, %151 : vector<1x32xf32>
    %153 = math.tanh %152 : vector<1x32xf32>
    %154 = arith.mulf %149, %153 : vector<1x32xf32>
    %c4 = arith.constant 4 : index
    %c0_37 = arith.constant 0 : index
    %155 = vector.load %arg7[%c4, %c0_37] : memref<8x128xf32, #tpu.memory_space<vmem>>, vector<1x32xf32>
    tpu.vector_store %arg7[%c4, %c0_37], %154 {strides = array<i32>} : memref<8x128xf32, #tpu.memory_space<vmem>>, vector<1x32xf32>,
    %156 = vector.extract_strided_slice %5 {offsets = [5, 0], sizes = [1, 128], strides = [1, 1]} : vector<8x128xf32> to vector<1x128xf32>
    %cst_38 = arith.constant dense<0.000000e+00> : vector<1x128xf32>
    %157 = tpu.matmul %154, %6, %cst_38 {dimension_numbers = #tpu.dot_dimension_numbers<[1], [0], [0], [1], [0, 0, 1, 1], [], []>} : vector<1x32xf32>, vector<32x128xf32>, vector<1x128xf32> -> vector<1x128xf32>
    %158 = arith.addf %156, %157 : vector<1x128xf32>
    %159 = vector.extract_strided_slice %158 {offsets = [0, 0], sizes = [1, 32], strides = [1, 1]} : vector<1x128xf32> to vector<1x32xf32>
    %160 = arith.negf %159 : vector<1x32xf32>
    %161 = math.exp %160 : vector<1x32xf32>
    %cst_39 = arith.constant 1.000000e+00 : f32
    %162 = vector.broadcast %cst_39 : f32 to vector<1x32xf32>
    %163 = arith.addf %162, %161 : vector<1x32xf32>
    %164 = arith.divf %162, %163 : vector<1x32xf32>
    %165 = vector.extract_strided_slice %158 {offsets = [0, 32], sizes = [1, 32], strides = [1, 1]} : vector<1x128xf32> to vector<1x32xf32>
    %166 = arith.negf %165 : vector<1x32xf32>
    %167 = math.exp %166 : vector<1x32xf32>
    %cst_40 = arith.constant 1.000000e+00 : f32
    %168 = vector.broadcast %cst_40 : f32 to vector<1x32xf32>
    %169 = arith.addf %168, %167 : vector<1x32xf32>
    %170 = arith.divf %168, %169 : vector<1x32xf32>
    %171 = vector.extract_strided_slice %158 {offsets = [0, 64], sizes = [1, 32], strides = [1, 1]} : vector<1x128xf32> to vector<1x32xf32>
    %172 = math.tanh %171 : vector<1x32xf32>
    %173 = vector.extract_strided_slice %158 {offsets = [0, 96], sizes = [1, 32], strides = [1, 1]} : vector<1x128xf32> to vector<1x32xf32>
    %174 = arith.negf %173 : vector<1x32xf32>
    %175 = math.exp %174 : vector<1x32xf32>
    %cst_41 = arith.constant 1.000000e+00 : f32
    %176 = vector.broadcast %cst_41 : f32 to vector<1x32xf32>
    %177 = arith.addf %176, %175 : vector<1x32xf32>
    %178 = arith.divf %176, %177 : vector<1x32xf32>
    %179 = arith.mulf %170, %152 : vector<1x32xf32>
    %180 = arith.mulf %164, %172 : vector<1x32xf32>
    %181 = arith.addf %179, %180 : vector<1x32xf32>
    %182 = math.tanh %181 : vector<1x32xf32>
    %183 = arith.mulf %178, %182 : vector<1x32xf32>
    %c5 = arith.constant 5 : index
    %c0_42 = arith.constant 0 : index
    %184 = vector.load %arg7[%c5, %c0_42] : memref<8x128xf32, #tpu.memory_space<vmem>>, vector<1x32xf32>
    tpu.vector_store %arg7[%c5, %c0_42], %183 {strides = array<i32>} : memref<8x128xf32, #tpu.memory_space<vmem>>, vector<1x32xf32>,
    %185 = vector.extract_strided_slice %5 {offsets = [6, 0], sizes = [1, 128], strides = [1, 1]} : vector<8x128xf32> to vector<1x128xf32>
    %cst_43 = arith.constant dense<0.000000e+00> : vector<1x128xf32>
    %186 = tpu.matmul %183, %6, %cst_43 {dimension_numbers = #tpu.dot_dimension_numbers<[1], [0], [0], [1], [0, 0, 1, 1], [], []>} : vector<1x32xf32>, vector<32x128xf32>, vector<1x128xf32> -> vector<1x128xf32>
    %187 = arith.addf %185, %186 : vector<1x128xf32>
    %188 = vector.extract_strided_slice %187 {offsets = [0, 0], sizes = [1, 32], strides = [1, 1]} : vector<1x128xf32> to vector<1x32xf32>
    %189 = arith.negf %188 : vector<1x32xf32>
    %190 = math.exp %189 : vector<1x32xf32>
    %cst_44 = arith.constant 1.000000e+00 : f32
    %191 = vector.broadcast %cst_44 : f32 to vector<1x32xf32>
    %192 = arith.addf %191, %190 : vector<1x32xf32>
    %193 = arith.divf %191, %192 : vector<1x32xf32>
    %194 = vector.extract_strided_slice %187 {offsets = [0, 32], sizes = [1, 32], strides = [1, 1]} : vector<1x128xf32> to vector<1x32xf32>
    %195 = arith.negf %194 : vector<1x32xf32>
    %196 = math.exp %195 : vector<1x32xf32>
    %cst_45 = arith.constant 1.000000e+00 : f32
    %197 = vector.broadcast %cst_45 : f32 to vector<1x32xf32>
    %198 = arith.addf %197, %196 : vector<1x32xf32>
    %199 = arith.divf %197, %198 : vector<1x32xf32>
    %200 = vector.extract_strided_slice %187 {offsets = [0, 64], sizes = [1, 32], strides = [1, 1]} : vector<1x128xf32> to vector<1x32xf32>
    %201 = math.tanh %200 : vector<1x32xf32>
    %202 = vector.extract_strided_slice %187 {offsets = [0, 96], sizes = [1, 32], strides = [1, 1]} : vector<1x128xf32> to vector<1x32xf32>
    %203 = arith.negf %202 : vector<1x32xf32>
    %204 = math.exp %203 : vector<1x32xf32>
    %cst_46 = arith.constant 1.000000e+00 : f32
    %205 = vector.broadcast %cst_46 : f32 to vector<1x32xf32>
    %206 = arith.addf %205, %204 : vector<1x32xf32>
    %207 = arith.divf %205, %206 : vector<1x32xf32>
    %208 = arith.mulf %199, %181 : vector<1x32xf32>
    %209 = arith.mulf %193, %201 : vector<1x32xf32>
    %210 = arith.addf %208, %209 : vector<1x32xf32>
    %211 = math.tanh %210 : vector<1x32xf32>
    %212 = arith.mulf %207, %211 : vector<1x32xf32>
    %c6 = arith.constant 6 : index
    %c0_47 = arith.constant 0 : index
    %213 = vector.load %arg7[%c6, %c0_47] : memref<8x128xf32, #tpu.memory_space<vmem>>, vector<1x32xf32>
    tpu.vector_store %arg7[%c6, %c0_47], %212 {strides = array<i32>} : memref<8x128xf32, #tpu.memory_space<vmem>>, vector<1x32xf32>,
    %214 = vector.extract_strided_slice %5 {offsets = [7, 0], sizes = [1, 128], strides = [1, 1]} : vector<8x128xf32> to vector<1x128xf32>
    %cst_48 = arith.constant dense<0.000000e+00> : vector<1x128xf32>
    %215 = tpu.matmul %212, %6, %cst_48 {dimension_numbers = #tpu.dot_dimension_numbers<[1], [0], [0], [1], [0, 0, 1, 1], [], []>} : vector<1x32xf32>, vector<32x128xf32>, vector<1x128xf32> -> vector<1x128xf32>
    %216 = arith.addf %214, %215 : vector<1x128xf32>
    %217 = vector.extract_strided_slice %216 {offsets = [0, 0], sizes = [1, 32], strides = [1, 1]} : vector<1x128xf32> to vector<1x32xf32>
    %218 = arith.negf %217 : vector<1x32xf32>
    %219 = math.exp %218 : vector<1x32xf32>
    %cst_49 = arith.constant 1.000000e+00 : f32
    %220 = vector.broadcast %cst_49 : f32 to vector<1x32xf32>
    %221 = arith.addf %220, %219 : vector<1x32xf32>
    %222 = arith.divf %220, %221 : vector<1x32xf32>
    %223 = vector.extract_strided_slice %216 {offsets = [0, 32], sizes = [1, 32], strides = [1, 1]} : vector<1x128xf32> to vector<1x32xf32>
    %224 = arith.negf %223 : vector<1x32xf32>
    %225 = math.exp %224 : vector<1x32xf32>
    %cst_50 = arith.constant 1.000000e+00 : f32
    %226 = vector.broadcast %cst_50 : f32 to vector<1x32xf32>
    %227 = arith.addf %226, %225 : vector<1x32xf32>
    %228 = arith.divf %226, %227 : vector<1x32xf32>
    %229 = vector.extract_strided_slice %216 {offsets = [0, 64], sizes = [1, 32], strides = [1, 1]} : vector<1x128xf32> to vector<1x32xf32>
    %230 = math.tanh %229 : vector<1x32xf32>
    %231 = vector.extract_strided_slice %216 {offsets = [0, 96], sizes = [1, 32], strides = [1, 1]} : vector<1x128xf32> to vector<1x32xf32>
    %232 = arith.negf %231 : vector<1x32xf32>
    %233 = math.exp %232 : vector<1x32xf32>
    %cst_51 = arith.constant 1.000000e+00 : f32
    %234 = vector.broadcast %cst_51 : f32 to vector<1x32xf32>
    %235 = arith.addf %234, %233 : vector<1x32xf32>
    %236 = arith.divf %234, %235 : vector<1x32xf32>
    %237 = arith.mulf %228, %210 : vector<1x32xf32>
    %238 = arith.mulf %222, %230 : vector<1x32xf32>
    %239 = arith.addf %237, %238 : vector<1x32xf32>
    %240 = math.tanh %239 : vector<1x32xf32>
    %241 = arith.mulf %236, %240 : vector<1x32xf32>
    %c7 = arith.constant 7 : index
    %c0_52 = arith.constant 0 : index
    %242 = vector.load %arg7[%c7, %c0_52] : memref<8x128xf32, #tpu.memory_space<vmem>>, vector<1x32xf32>
    tpu.vector_store %arg7[%c7, %c0_52], %241 {strides = array<i32>} : memref<8x128xf32, #tpu.memory_space<vmem>>, vector<1x32xf32>,
    %c0_53 = arith.constant 0 : index
    %c0_54 = arith.constant 0 : index
    %243 = vector.load %arg7[%c0_53, %c0_54] : memref<8x128xf32, #tpu.memory_space<vmem>>, vector<8x128xf32>
    %c0_55 = arith.constant 0 : index
    %c0_56 = arith.constant 0 : index
    %244 = vector.load %arg4[%c0_55, %c0_56] : memref<128x128xf32, #tpu.memory_space<vmem>>, vector<128x128xf32>
    %cst_57 = arith.constant dense<0.000000e+00> : vector<8x128xf32>
    %245 = tpu.matmul %243, %244, %cst_57 {dimension_numbers = #tpu.dot_dimension_numbers<[1], [0], [0], [1], [0, 0, 1, 1], [], []>} : vector<8x128xf32>, vector<128x128xf32>, vector<8x128xf32> -> vector<8x128xf32>
    %c0_58 = arith.constant 0 : index
    %c0_59 = arith.constant 0 : index
    %246 = vector.load %arg5[%c0_58, %c0_59] : memref<1x128xf32, #tpu.memory_space<vmem>>, vector<1x128xf32>
    %247 = vector.broadcast %246 : vector<1x128xf32> to vector<8x128xf32>
    %248 = arith.addf %245, %247 : vector<8x128xf32>
    %cst_60 = arith.constant dense<0xFF800000> : vector<8xf32>
    %249 = vector.multi_reduction <maximumf>, %248, %cst_60 [1] : vector<8x128xf32> to vector<8xf32>
    %250 = vector.shape_cast %249 : vector<8xf32> to vector<8x1xf32>
    %251 = vector.broadcast %250 : vector<8x1xf32> to vector<8x128xf32>
    %252 = arith.subf %248, %251 : vector<8x128xf32>
    %253 = math.exp %252 : vector<8x128xf32>
    %cst_61 = arith.constant dense<0.000000e+00> : vector<8xf32>
    %254 = vector.multi_reduction <add>, %253, %cst_61 [1] : vector<8x128xf32> to vector<8xf32>
    %255 = vector.shape_cast %254 : vector<8xf32> to vector<8x1xf32>
    %256 = math.log %255 : vector<8x1xf32>
    %257 = arith.addf %250, %256 : vector<8x1xf32>
    %258 = vector.broadcast %257 : vector<8x1xf32> to vector<8x128xf32>
    %259 = arith.subf %248, %258 : vector<8x128xf32>
    %c0_62 = arith.constant 0 : index
    %c0_63 = arith.constant 0 : index
    %260 = vector.load %arg6[%c0_62, %c0_63] : memref<8x128xf32, #tpu.memory_space<vmem>>, vector<8x128xf32>
    tpu.vector_store %arg6[%c0_62, %c0_63], %259 {strides = array<i32>} : memref<8x128xf32, #tpu.memory_space<vmem>>, vector<8x128xf32>,
    return
  }
}

</mosaic_0001>

<llo_original>
// kernel: lstm_ocr_forward.1
$region0: #{lstm_ocr_forward.1}
  #allocation0 [shape = 'u32[]', space=smem, size = 0x4, offset = 0x4, fixed_abs, tag = 'smem constant byte address 0x4 - core index']
  #allocation1 [shape = 'u32[144,128]{1,0:T(1,128)}', space=vmem, size = 0x12000, scoped, tag = 'internal scratch']
  #allocation2 [shape = 'f32[8,128]{1,0:T(8,128)}', space=vmem, size = 0x1000, scoped, tag = 'scratch operand']
  %s0 = inlined_call_operand.vmem [shape: f32[8,16], index: 0, kind: input, shape index: {}]
  %s1 = inlined_call_operand.vmem [shape: f32[16,128], index: 1, kind: input, shape index: {}]
  %s2 = inlined_call_operand.vmem [shape: f32[32,128], index: 2, kind: input, shape index: {}]
  %s3 = inlined_call_operand.vmem [shape: f32[1,128], index: 3, kind: input, shape index: {}]
  %s4 = inlined_call_operand.vmem [shape: f32[128,128], index: 4, kind: input, shape index: {}]
  %s5 = inlined_call_operand.vmem [shape: f32[1,128], index: 5, kind: input, shape index: {}]
  %s6 = inlined_call_operand.hbm [shape: f32[8,128], index: 6, kind: output, shape index: {}]
  %s7 = sld [smem:[#allocation0]]
  $region34: #{lstm_ocr_forward.1} parent=0
    _
  %s9 = ssub.s32 1, %s7
  %s10 = scalar_select 0, %s9, %s7
  $region1: #{lstm_ocr_forward.1} parent=0
    #allocation3 [shape = 'u8[4096]{0}', space=vmem, size = 0x1000, scoped, tag = 'output window, operand 0, single buffered']
    #allocation4 [shape = 's32[1]{0}', space=sflag, size = 0x4, scoped, tag = 'scoped memory for lstm_ocr_forward.1']
    %11 = vsyncpa [#allocation4], 0
    // Predicated region
    $region2: #{lstm_ocr_forward.1} parent=1 // pred_check
      _
    $region3: #{lstm_ocr_forward.1} parent=1 // pred_check_branch
      %13 = sbr.rel (0) target = $region5
    $region4: #{lstm_ocr_forward.1} parent=1 // pred_region
      _
    $region5: #{lstm_ocr_forward.1} parent=1 // pred_fallthru
      _
    // Predicated region
    $region6: #{lstm_ocr_forward.1} parent=1 // pred_check
      _
    $region7: #{lstm_ocr_forward.1} parent=1 // pred_check_branch
      %15 = sbr.rel (0) target = $region9
    $region8: #{lstm_ocr_forward.1} parent=1 // pred_region
      _
    $region9: #{lstm_ocr_forward.1} parent=1 // pred_fallthru
      _
    // Predicated region
    $region10: #{lstm_ocr_forward.1} parent=1 // pred_check
      _
    $region11: #{lstm_ocr_forward.1} parent=1 // pred_check_branch
      %17 = sbr.rel (0) target = $region13
    $region12: #{lstm_ocr_forward.1} parent=1 // pred_region
      _
    $region13: #{lstm_ocr_forward.1} parent=1 // pred_fallthru
      _
    // Predicated region
    $region14: #{lstm_ocr_forward.1} parent=1 // pred_check
      _
    $region15: #{lstm_ocr_forward.1} parent=1 // pred_check_branch
      %19 = sbr.rel (0) target = $region17
    $region16: #{lstm_ocr_forward.1} parent=1 // pred_region
      _
    $region17: #{lstm_ocr_forward.1} parent=1 // pred_fallthru
      _
    // Predicated region
    $region18: #{lstm_ocr_forward.1} parent=1 // pred_check
      _
    $region19: #{lstm_ocr_forward.1} parent=1 // pred_check_branch
      %21 = sbr.rel (0) target = $region21
    $region20: #{lstm_ocr_forward.1} parent=1 // pred_region
      _
    $region21: #{lstm_ocr_forward.1} parent=1 // pred_fallthru
      _
    // Predicated region
    $region22: #{lstm_ocr_forward.1} parent=1 // pred_check
      _
    $region23: #{lstm_ocr_forward.1} parent=1 // pred_check_branch
      %23 = sbr.rel (0) target = $region25
    $region24: #{lstm_ocr_forward.1} parent=1 // pred_region
      _
    $region25: #{lstm_ocr_forward.1} parent=1 // pred_fallthru
      _
    %v24 = vld [vmem:[%s0] sm:$0xff]
    %v25 = vld [vmem:[%s1] sm:$0xff]
    %v26 = vld [vmem:[%s1 + $0x8] sm:$0xff]
    %v27 = vld [vmem:[%s3] sm:$0x1]
    %v29 = vlaneseq
    %v30 = vshrl.u32 %v29, 7
    %v31 = vsub.s32 0, %v30
    %v32 = vrot.slane %v27, %v31
    %vm34 = vcmask 130048
    %v36 = vsel %vm34, %v24, 0
    %38 = vmatprep.subr.mxu0 0.0
    %39 = vmatpush1.msra.mxu0 %v25
    %40 = vmatprep.subr.mxu0 0.0
    %41 = vmatpush1.msra.mxu0 %v26
    %42 = vmatprep.subr.mxu0 0.0
    %43 = vmatpush1.msra.mxu0 0.0
    %44 = vmatprep.subr.mxu0 0.0
    %45 = vmatpush1.msra.mxu0 0.0
    %46 = vmatprep.subr.mxu0 0.0
    %47 = vmatpush1.msra.mxu0 0.0
    %48 = vmatprep.subr.mxu0 0.0
    %49 = vmatpush1.msra.mxu0 0.0
    %50 = vmatprep.subr.mxu0 0.0
    %51 = vmatpush1.msra.mxu0 0.0
    %52 = vmatprep.subr.mxu0 0.0
    %53 = vmatpush1.msra.mxu0 0.0
    %54 = vmatprep.subr.mxu0 0.0
    %55 = vmatpush1.msra.mxu0 0.0
    %56 = vmatprep.subr.mxu0 0.0
    %57 = vmatpush1.msra.mxu0 0.0
    %58 = vmatprep.subr.mxu0 0.0
    %59 = vmatpush1.msra.mxu0 0.0
    %60 = vmatprep.subr.mxu0 0.0
    %61 = vmatpush1.msra.mxu0 0.0
    %62 = vmatprep.subr.mxu0 0.0
    %63 = vmatpush1.msra.mxu0 0.0
    %64 = vmatprep.subr.mxu0 0.0
    %65 = vmatpush1.msra.mxu0 0.0
    %66 = vmatprep.subr.mxu0 0.0
    %67 = vmatpush1.msra.mxu0 0.0
    %68 = vmatprep.subr.mxu0 0.0
    %69 = vmatpush1.msra.mxu0 0.0
    %70 = vmatprep.subr.mxu0 0.0
    %71 = vmatpush1.msra.mxu0 0.0
    %72 = vmatprep.subr.mxu0 0.0
    %73 = vmatpush1.msra.mxu0 0.0
    %74 = vmatprep.subr.mxu0 0.0
    %75 = vmatpush1.msra.mxu0 0.0
    %76 = vmatprep.subr.mxu0 0.0
    %77 = vmatpush1.msra.mxu0 0.0
    %78 = vmatprep.subr.mxu0 0.0
    %79 = vmatpush1.msra.mxu0 0.0
    %80 = vmatprep.subr.mxu0 0.0
    %81 = vmatpush1.msra.mxu0 0.0
    %82 = vmatprep.subr.mxu0 0.0
    %83 = vmatpush1.msra.mxu0 0.0
    %84 = vmatprep.subr.mxu0 0.0
    %85 = vmatpush1.msra.mxu0 0.0
    %86 = vmatprep.subr.mxu0 0.0
    %87 = vmatpush1.msra.mxu0 0.0
    %88 = vmatprep.subr.mxu0 0.0
    %89 = vmatpush1.msra.mxu0 0.0
    %90 = vmatprep.subr.mxu0 0.0
    %91 = vmatpush1.msra.mxu0 0.0
    %92 = vmatprep.subr.mxu0 0.0
    %93 = vmatpush1.msra.mxu0 0.0
    %94 = vmatprep.subr.mxu0 0.0
    %95 = vmatpush1.msra.mxu0 0.0
    %96 = vmatprep.subr.mxu0 0.0
    %97 = vmatpush1.msra.mxu0 0.0
    %98 = vmatprep.subr.mxu0 0.0
    %99 = vmatpush1.msra.mxu0 0.0
    %100 = vmatprep.subr.mxu0 0.0
    %101 = vmatpush1.msra.mxu0 0.0
    %102 = vmatprep.mubr.f32.mxu0 0.0
    %103 = vmatmul.mubr.f32.gmra.mrb[0].mxu0 %v36
    %v104 = vpop.f32.mrb[0].mxu0
    %v105 = vadd.f32 %v32, %v104
    %v106 = vpop.f32.mrb[0].mxu0
    %107 = vdwg.mxu0
    %v108 = vld [vmem:[%s2] sm:$0xff]
    %v109 = vld [vmem:[%s2 + $0x8] sm:$0xff]
    %v110 = vld [vmem:[%s2 + $0x10] sm:$0xff]
    %v111 = vld [vmem:[%s2 + $0x18] sm:$0xff]
    %112 = vst [vmem:[#allocation2] sm:$0xff] 0.0
    %vm113 = vcmask 261120
    %v115 = vsel %vm113, 0.0, 0
    %117 = vmatprep.subr.mxu0 0.0
    %118 = vmatpush1.msra.mxu0 %v108
    %119 = vmatprep.subr.mxu0 0.0
    %120 = vmatpush1.msra.mxu0 %v109
    %121 = vmatprep.subr.mxu0 0.0
    %122 = vmatpush1.msra.mxu0 %v110
    %123 = vmatprep.subr.mxu0 0.0
    %124 = vmatpush1.msra.mxu0 %v111
    %125 = vmatprep.subr.mxu0 0.0
    %126 = vmatpush1.msra.mxu0 0.0
    %127 = vmatprep.subr.mxu0 0.0
    %128 = vmatpush1.msra.mxu0 0.0
    %129 = vmatprep.subr.mxu0 0.0
    %130 = vmatpush1.msra.mxu0 0.0
    %131 = vmatprep.subr.mxu0 0.0
    %132 = vmatpush1.msra.mxu0 0.0
    %133 = vmatprep.subr.mxu0 0.0
    %134 = vmatpush1.msra.mxu0 0.0
    %135 = vmatprep.subr.mxu0 0.0
    %136 = vmatpush1.msra.mxu0 0.0
    %137 = vmatprep.subr.mxu0 0.0
    %138 = vmatpush1.msra.mxu0 0.0
    %139 = vmatprep.subr.mxu0 0.0
    %140 = vmatpush1.msra.mxu0 0.0
    %141 = vmatprep.subr.mxu0 0.0
    %142 = vmatpush1.msra.mxu0 0.0
    %143 = vmatprep.subr.mxu0 0.0
    %144 = vmatpush1.msra.mxu0 0.0
    %145 = vmatprep.subr.mxu0 0.0
    %146 = vmatpush1.msra.mxu0 0.0
    %147 = vmatprep.subr.mxu0 0.0
    %148 = vmatpush1.msra.mxu0 0.0
    %149 = vmatprep.subr.mxu0 0.0
    %150 = vmatpush1.msra.mxu0 0.0
    %151 = vmatprep.subr.mxu0 0.0
    %152 = vmatpush1.msra.mxu0 0.0
    %153 = vmatprep.subr.mxu0 0.0
    %154 = vmatpush1.msra.mxu0 0.0
    %155 = vmatprep.subr.mxu0 0.0
    %156 = vmatpush1.msra.mxu0 0.0
    %157 = vmatprep.subr.mxu0 0.0
    %158 = vmatpush1.msra.mxu0 0.0
    %159 = vmatprep.subr.mxu0 0.0
    %160 = vmatpush1.msra.mxu0 0.0
    %161 = vmatprep.subr.mxu0 0.0
    %162 = vmatpush1.msra.mxu0 0.0
    %163 = vmatprep.subr.mxu0 0.0
    %164 = vmatpush1.msra.mxu0 0.0
    %165 = vmatprep.subr.mxu0 0.0
    %166 = vmatpush1.msra.mxu0 0.0
    %167 = vmatprep.subr.mxu0 0.0
    %168 = vmatpush1.msra.mxu0 0.0
    %169 = vmatprep.subr.mxu0 0.0
    %170 = vmatpush1.msra.mxu0 0.0
    %171 = vmatprep.subr.mxu0 0.0
    %172 = vmatpush1.msra.mxu0 0.0
    %173 = vmatprep.subr.mxu0 0.0
    %174 = vmatpush1.msra.mxu0 0.0
    %175 = vmatprep.subr.mxu0 0.0
    %176 = vmatpush1.msra.mxu0 0.0
    %177 = vmatprep.subr.mxu0 0.0
    %178 = vmatpush1.msra.mxu0 0.0
    %179 = vmatprep.subr.mxu0 0.0
    %180 = vmatpush1.msra.mxu0 0.0
    %181 = vmatprep.mubr.f32.mxu0 0.0
    %182 = vmatmul.mubr.f32.gmra.mrb[0].mxu0 %v115
    %v183 = vpop.f32.mrb[0].mxu0
    %v184 = vadd.f32 0.0, %v183
    %v185 = vpop.f32.mrb[0].mxu0
    %186 = vdwg.mxu0
    %v187 = vadd.f32 %v105, %v184
    %v188 = vxor.u32 %v187, 2147483648
    %v189 = vmul.f32 %v188, 1.442695
    %v190 = vpow.pop %v189
    %v191 = vadd.f32 %v190, 1.0
    %v192 = vrcp.pop %v191
    %v193 = vmul.f32 1.0, %v192
    %v194 = vtanh.pop %v187
    %v195 = vmul.f32 %v193, 0.0
    %197 = vrot.lane.b32.xlu0 %v194, 64
    %v198 = vpop.permute.xlu0 %197
    %v200 = vmul.f32 %v193, %v198
    %202 = vrot.lane.b32.xlu0 %v200, 32
    %v203 = vpop.permute.xlu0 %202
    %v205 = vadd.f32 %v195, %v203
    %v206 = vtanh.pop %v205
    %208 = vrot.lane.b32.xlu0 %v206, 64
    %v209 = vpop.permute.xlu0 %208
    %v211 = vmul.f32 %v193, %v209
    %213 = vrot.lane.b32.xlu0 %v211, 32
    %v214 = vpop.permute.xlu0 %213
    %vm216 = vcmask 253952
    %217 = vst.msk [vmem:[#allocation2] sm:$0x1] %vm216, %v214
    %v218 = vsel %vm113, %v214, 0
    %220 = vmatprep.subr.mxu0 0.0
    %221 = vmatpush1.msra.mxu0 %v108
    %222 = vmatprep.subr.mxu0 0.0
    %223 = vmatpush1.msra.mxu0 %v109
    %224 = vmatprep.subr.mxu0 0.0
    %225 = vmatpush1.msra.mxu0 %v110
    %226 = vmatprep.subr.mxu0 0.0
    %227 = vmatpush1.msra.mxu0 %v111
    %228 = vmatprep.subr.mxu0 0.0
    %229 = vmatpush1.msra.mxu0 0.0
    %230 = vmatprep.subr.mxu0 0.0
    %231 = vmatpush1.msra.mxu0 0.0
    %232 = vmatprep.subr.mxu0 0.0
    %233 = vmatpush1.msra.mxu0 0.0
    %234 = vmatprep.subr.mxu0 0.0
    %235 = vmatpush1.msra.mxu0 0.0
    %236 = vmatprep.subr.mxu0 0.0
    %237 = vmatpush1.msra.mxu0 0.0
    %238 = vmatprep.subr.mxu0 0.0
    %239 = vmatpush1.msra.mxu0 0.0
    %240 = vmatprep.subr.mxu0 0.0
    %241 = vmatpush1.msra.mxu0 0.0
    %242 = vmatprep.subr.mxu0 0.0
    %243 = vmatpush1.msra.mxu0 0.0
    %244 = vmatprep.subr.mxu0 0.0
    %245 = vmatpush1.msra.mxu0 0.0
    %246 = vmatprep.subr.mxu0 0.0
    %247 = vmatpush1.msra.mxu0 0.0
    %248 = vmatprep.subr.mxu0 0.0
    %249 = vmatpush1.msra.mxu0 0.0
    %250 = vmatprep.subr.mxu0 0.0
    %251 = vmatpush1.msra.mxu0 0.0
    %252 = vmatprep.subr.mxu0 0.0
    %253 = vmatpush1.msra.mxu0 0.0
    %254 = vmatprep.subr.mxu0 0.0
    %255 = vmatpush1.msra.mxu0 0.0
    %256 = vmatprep.subr.mxu0 0.0
    %257 = vmatpush1.msra.mxu0 0.0
    %258 = vmatprep.subr.mxu0 0.0
    %259 = vmatpush1.msra.mxu0 0.0
    %260 = vmatprep.subr.mxu0 0.0
    %261 = vmatpush1.msra.mxu0 0.0
    %262 = vmatprep.subr.mxu0 0.0
    %263 = vmatpush1.msra.mxu0 0.0
    %264 = vmatprep.subr.mxu0 0.0
    %265 = vmatpush1.msra.mxu0 0.0
    %266 = vmatprep.subr.mxu0 0.0
    %267 = vmatpush1.msra.mxu0 0.0
    %268 = vmatprep.subr.mxu0 0.0
    %269 = vmatpush1.msra.mxu0 0.0
    %270 = vmatprep.subr.mxu0 0.0
    %271 = vmatpush1.msra.mxu0 0.0
    %272 = vmatprep.subr.mxu0 0.0
    %273 = vmatpush1.msra.mxu0 0.0
    %274 = vmatprep.subr.mxu0 0.0
    %275 = vmatpush1.msra.mxu0 0.0
    %276 = vmatprep.subr.mxu0 0.0
    %277 = vmatpush1.msra.mxu0 0.0
    %278 = vmatprep.subr.mxu0 0.0
    %279 = vmatpush1.msra.mxu0 0.0
    %280 = vmatprep.subr.mxu0 0.0
    %281 = vmatpush1.msra.mxu0 0.0
    %282 = vmatprep.subr.mxu0 0.0
    %283 = vmatpush1.msra.mxu0 0.0
    %284 = vmatprep.mubr.f32.mxu0 0.0
    %285 = vmatmul.mubr.f32.gmra.mrb[0].mxu0 %v218
    %v286 = vpop.f32.mrb[0].mxu0
    %v287 = vadd.f32 0.0, %v286
    %v288 = vpop.f32.mrb[0].mxu0
    %289 = vdwg.mxu0
    %v291 = vrot.slane %v287, 7
    %v293 = vadd.f32 %v105, %v291
    %v294 = vxor.u32 %v293, 2147483648
    %v295 = vmul.f32 %v294, 1.442695
    %v296 = vpow.pop %v295
    %v297 = vadd.f32 %v296, 1.0
    %v298 = vrcp.pop %v297
    %v299 = vmul.f32 1.0, %v298
    %v300 = vtanh.pop %v293
    %v302 = vrot.slane %v205, 7
    %v304 = vmul.f32 %v299, %v302
    %306 = vrot.lane.b32.xlu0 %v300, 64
    %v307 = vpop.permute.xlu0 %306
    %v309 = vmul.f32 %v299, %v307
    %311 = vrot.lane.b32.xlu0 %v309, 32
    %v312 = vpop.permute.xlu0 %311
    %v314 = vadd.f32 %v304, %v312
    %v315 = vtanh.pop %v314
    %317 = vrot.lane.b32.xlu0 %v315, 64
    %v318 = vpop.permute.xlu0 %317
    %v320 = vmul.f32 %v299, %v318
    %322 = vrot.lane.b32.xlu0 %v320, 32
    %v323 = vpop.permute.xlu0 %322
    %vm325 = vcmask 254977
    %326 = vst.msk [vmem:[#allocation2] sm:$0x2] %vm325, %v323
    %v327 = vrot.slane %v320, 1
    %328 = vrot.lane.b32.xlu0 %v327, 32
    %v329 = vpop.permute.xlu0 %328
    %v330 = vsel %vm113, %v329, 0
    %332 = vmatprep.subr.mxu0 0.0
    %333 = vmatpush1.msra.mxu0 %v108
    %334 = vmatprep.subr.mxu0 0.0
    %335 = vmatpush1.msra.mxu0 %v109
    %336 = vmatprep.subr.mxu0 0.0
    %337 = vmatpush1.msra.mxu0 %v110
    %338 = vmatprep.subr.mxu0 0.0
    %339 = vmatpush1.msra.mxu0 %v111
    %340 = vmatprep.subr.mxu0 0.0
    %341 = vmatpush1.msra.mxu0 0.0
    %342 = vmatprep.subr.mxu0 0.0
    %343 = vmatpush1.msra.mxu0 0.0
    %344 = vmatprep.subr.mxu0 0.0
    %345 = vmatpush1.msra.mxu0 0.0
    %346 = vmatprep.subr.mxu0 0.0
    %347 = vmatpush1.msra.mxu0 0.0
    %348 = vmatprep.subr.mxu0 0.0
    %349 = vmatpush1.msra.mxu0 0.0
    %350 = vmatprep.subr.mxu0 0.0
    %351 = vmatpush1.msra.mxu0 0.0
    %352 = vmatprep.subr.mxu0 0.0
    %353 = vmatpush1.msra.mxu0 0.0
    %354 = vmatprep.subr.mxu0 0.0
    %355 = vmatpush1.msra.mxu0 0.0
    %356 = vmatprep.subr.mxu0 0.0
    %357 = vmatpush1.msra.mxu0 0.0
    %358 = vmatprep.subr.mxu0 0.0
    %359 = vmatpush1.msra.mxu0 0.0
    %360 = vmatprep.subr.mxu0 0.0
    %361 = vmatpush1.msra.mxu0 0.0
    %362 = vmatprep.subr.mxu0 0.0
    %363 = vmatpush1.msra.mxu0 0.0
    %364 = vmatprep.subr.mxu0 0.0
    %365 = vmatpush1.msra.mxu0 0.0
    %366 = vmatprep.subr.mxu0 0.0
    %367 = vmatpush1.msra.mxu0 0.0
    %368 = vmatprep.subr.mxu0 0.0
    %369 = vmatpush1.msra.mxu0 0.0
    %370 = vmatprep.subr.mxu0 0.0
    %371 = vmatpush1.msra.mxu0 0.0
    %372 = vmatprep.subr.mxu0 0.0
    %373 = vmatpush1.msra.mxu0 0.0
    %374 = vmatprep.subr.mxu0 0.0
    %375 = vmatpush1.msra.mxu0 0.0
    %376 = vmatprep.subr.mxu0 0.0
    %377 = vmatpush1.msra.mxu0 0.0
    %378 = vmatprep.subr.mxu0 0.0
    %379 = vmatpush1.msra.mxu0 0.0
    %380 = vmatprep.subr.mxu0 0.0
    %381 = vmatpush1.msra.mxu0 0.0
    %382 = vmatprep.subr.mxu0 0.0
    %383 = vmatpush1.msra.mxu0 0.0
    %384 = vmatprep.subr.mxu0 0.0
    %385 = vmatpush1.msra.mxu0 0.0
    %386 = vmatprep.subr.mxu0 0.0
    %387 = vmatpush1.msra.mxu0 0.0
    %388 = vmatprep.subr.mxu0 0.0
    %389 = vmatpush1.msra.mxu0 0.0
    %390 = vmatprep.subr.mxu0 0.0
    %391 = vmatpush1.msra.mxu0 0.0
    %392 = vmatprep.subr.mxu0 0.0
    %393 = vmatpush1.msra.mxu0 0.0
    %394 = vmatprep.subr.mxu0 0.0
    %395 = vmatpush1.msra.mxu0 0.0
    %396 = vmatprep.mubr.f32.mxu0 0.0
    %397 = vmatmul.mubr.f32.gmra.mrb[0].mxu0 %v330
    %v398 = vpop.f32.mrb[0].mxu0
    %v399 = vadd.f32 0.0, %v398
    %v400 = vpop.f32.mrb[0].mxu0
    %401 = vdwg.mxu0
    %v403 = vrot.slane %v399, 6
    %v405 = vadd.f32 %v105, %v403
    %v406 = vxor.u32 %v405, 2147483648
    %v407 = vmul.f32 %v406, 1.442695
    %v408 = vpow.pop %v407
    %v409 = vadd.f32 %v408, 1.0
    %v410 = vrcp.pop %v409
    %v411 = vmul.f32 1.0, %v410
    %v412 = vtanh.pop %v405
    %v414 = vrot.slane %v314, 7
    %v416 = vmul.f32 %v411, %v414
    %418 = vrot.lane.b32.xlu0 %v412, 64
    %v419 = vpop.permute.xlu0 %418
    %v421 = vmul.f32 %v411, %v419
    %423 = vrot.lane.b32.xlu0 %v421, 32
    %v424 = vpop.permute.xlu0 %423
    %v426 = vadd.f32 %v416, %v424
    %v427 = vtanh.pop %v426
    %429 = vrot.lane.b32.xlu0 %v427, 64
    %v430 = vpop.permute.xlu0 %429
    %v432 = vmul.f32 %v411, %v430
    %434 = vrot.lane.b32.xlu0 %v432, 32
    %v435 = vpop.permute.xlu0 %434
    %vm437 = vcmask 256002
    %438 = vst.msk [vmem:[#allocation2] sm:$0x4] %vm437, %v435
    %v439 = vrot.slane %v432, 2
    %440 = vrot.lane.b32.xlu0 %v439, 32
    %v441 = vpop.permute.xlu0 %440
    %v442 = vsel %vm113, %v441, 0
    %444 = vmatprep.subr.mxu0 0.0
    %445 = vmatpush1.msra.mxu0 %v108
    %446 = vmatprep.subr.mxu0 0.0
    %447 = vmatpush1.msra.mxu0 %v109
    %448 = vmatprep.subr.mxu0 0.0
    %449 = vmatpush1.msra.mxu0 %v110
    %450 = vmatprep.subr.mxu0 0.0
    %451 = vmatpush1.msra.mxu0 %v111
    %452 = vmatprep.subr.mxu0 0.0
    %453 = vmatpush1.msra.mxu0 0.0
    %454 = vmatprep.subr.mxu0 0.0
    %455 = vmatpush1.msra.mxu0 0.0
    %456 = vmatprep.subr.mxu0 0.0
    %457 = vmatpush1.msra.mxu0 0.0
    %458 = vmatprep.subr.mxu0 0.0
    %459 = vmatpush1.msra.mxu0 0.0
    %460 = vmatprep.subr.mxu0 0.0
    %461 = vmatpush1.msra.mxu0 0.0
    %462 = vmatprep.subr.mxu0 0.0
    %463 = vmatpush1.msra.mxu0 0.0
    %464 = vmatprep.subr.mxu0 0.0
    %465 = vmatpush1.msra.mxu0 0.0
    %466 = vmatprep.subr.mxu0 0.0
    %467 = vmatpush1.msra.mxu0 0.0
    %468 = vmatprep.subr.mxu0 0.0
    %469 = vmatpush1.msra.mxu0 0.0
    %470 = vmatprep.subr.mxu0 0.0
    %471 = vmatpush1.msra.mxu0 0.0
    %472 = vmatprep.subr.mxu0 0.0
    %473 = vmatpush1.msra.mxu0 0.0
    %474 = vmatprep.subr.mxu0 0.0
    %475 = vmatpush1.msra.mxu0 0.0
    %476 = vmatprep.subr.mxu0 0.0
    %477 = vmatpush1.msra.mxu0 0.0
    %478 = vmatprep.subr.mxu0 0.0
    %479 = vmatpush1.msra.mxu0 0.0
    %480 = vmatprep.subr.mxu0 0.0
    %481 = vmatpush1.msra.mxu0 0.0
    %482 = vmatprep.subr.mxu0 0.0
    %483 = vmatpush1.msra.mxu0 0.0
    %484 = vmatprep.subr.mxu0 0.0
    %485 = vmatpush1.msra.mxu0 0.0
    %486 = vmatprep.subr.mxu0 0.0
    %487 = vmatpush1.msra.mxu0 0.0
    %488 = vmatprep.subr.mxu0 0.0
    %489 = vmatpush1.msra.mxu0 0.0
    %490 = vmatprep.subr.mxu0 0.0
    %491 = vmatpush1.msra.mxu0 0.0
    %492 = vmatprep.subr.mxu0 0.0
    %493 = vmatpush1.msra.mxu0 0.0
    %494 = vmatprep.subr.mxu0 0.0
    %495 = vmatpush1.msra.mxu0 0.0
    %496 = vmatprep.subr.mxu0 0.0
    %497 = vmatpush1.msra.mxu0 0.0
    %498 = vmatprep.subr.mxu0 0.0
    %499 = vmatpush1.msra.mxu0 0.0
    %500 = vmatprep.subr.mxu0 0.0
    %501 = vmatpush1.msra.mxu0 0.0
    %502 = vmatprep.subr.mxu0 0.0
    %503 = vmatpush1.msra.mxu0 0.0
    %504 = vmatprep.subr.mxu0 0.0
    %505 = vmatpush1.msra.mxu0 0.0
    %506 = vmatprep.subr.mxu0 0.0
    %507 = vmatpush1.msra.mxu0 0.0
    %508 = vmatprep.mubr.f32.mxu0 0.0
    %509 = vmatmul.mubr.f32.gmra.mrb[0].mxu0 %v442
    %v510 = vpop.f32.mrb[0].mxu0
    %v511 = vadd.f32 0.0, %v510
    %v512 = vpop.f32.mrb[0].mxu0
    %513 = vdwg.mxu0
    %v515 = vrot.slane %v511, 5
    %v517 = vadd.f32 %v105, %v515
    %v518 = vxor.u32 %v517, 2147483648
    %v519 = vmul.f32 %v518, 1.442695
    %v520 = vpow.pop %v519
    %v521 = vadd.f32 %v520, 1.0
    %v522 = vrcp.pop %v521
    %v523 = vmul.f32 1.0, %v522
    %v524 = vtanh.pop %v517
    %v526 = vrot.slane %v426, 7
    %v528 = vmul.f32 %v523, %v526
    %530 = vrot.lane.b32.xlu0 %v524, 64
    %v531 = vpop.permute.xlu0 %530
    %v533 = vmul.f32 %v523, %v531
    %535 = vrot.lane.b32.xlu0 %v533, 32
    %v536 = vpop.permute.xlu0 %535
    %v538 = vadd.f32 %v528, %v536
    %v539 = vtanh.pop %v538
    %541 = vrot.lane.b32.xlu0 %v539, 64
    %v542 = vpop.permute.xlu0 %541
    %v544 = vmul.f32 %v523, %v542
    %546 = vrot.lane.b32.xlu0 %v544, 32
    %v547 = vpop.permute.xlu0 %546
    %vm549 = vcmask 257027
    %550 = vst.msk [vmem:[#allocation2] sm:$0x8] %vm549, %v547
    %v551 = vrot.slane %v544, 3
    %552 = vrot.lane.b32.xlu0 %v551, 32
    %v553 = vpop.permute.xlu0 %552
    %v554 = vsel %vm113, %v553, 0
    %556 = vmatprep.subr.mxu0 0.0
    %557 = vmatpush1.msra.mxu0 %v108
    %558 = vmatprep.subr.mxu0 0.0
    %559 = vmatpush1.msra.mxu0 %v109
    %560 = vmatprep.subr.mxu0 0.0
    %561 = vmatpush1.msra.mxu0 %v110
    %562 = vmatprep.subr.mxu0 0.0
    %563 = vmatpush1.msra.mxu0 %v111
    %564 = vmatprep.subr.mxu0 0.0
    %565 = vmatpush1.msra.mxu0 0.0
    %566 = vmatprep.subr.mxu0 0.0
    %567 = vmatpush1.msra.mxu0 0.0
    %568 = vmatprep.subr.mxu0 0.0
    %569 = vmatpush1.msra.mxu0 0.0
    %570 = vmatprep.subr.mxu0 0.0
    %571 = vmatpush1.msra.mxu0 0.0
    %572 = vmatprep.subr.mxu0 0.0
    %573 = vmatpush1.msra.mxu0 0.0
    %574 = vmatprep.subr.mxu0 0.0
    %575 = vmatpush1.msra.mxu0 0.0
    %576 = vmatprep.subr.mxu0 0.0
    %577 = vmatpush1.msra.mxu0 0.0
    %578 = vmatprep.subr.mxu0 0.0
    %579 = vmatpush1.msra.mxu0 0.0
    %580 = vmatprep.subr.mxu0 0.0
    %581 = vmatpush1.msra.mxu0 0.0
    %582 = vmatprep.subr.mxu0 0.0
    %583 = vmatpush1.msra.mxu0 0.0
    %584 = vmatprep.subr.mxu0 0.0
    %585 = vmatpush1.msra.mxu0 0.0
    %586 = vmatprep.subr.mxu0 0.0
    %587 = vmatpush1.msra.mxu0 0.0
    %588 = vmatprep.subr.mxu0 0.0
    %589 = vmatpush1.msra.mxu0 0.0
    %590 = vmatprep.subr.mxu0 0.0
    %591 = vmatpush1.msra.mxu0 0.0
    %592 = vmatprep.subr.mxu0 0.0
    %593 = vmatpush1.msra.mxu0 0.0
    %594 = vmatprep.subr.mxu0 0.0
    %595 = vmatpush1.msra.mxu0 0.0
    %596 = vmatprep.subr.mxu0 0.0
    %597 = vmatpush1.msra.mxu0 0.0
    %598 = vmatprep.subr.mxu0 0.0
    %599 = vmatpush1.msra.mxu0 0.0
    %600 = vmatprep.subr.mxu0 0.0
    %601 = vmatpush1.msra.mxu0 0.0
    %602 = vmatprep.subr.mxu0 0.0
    %603 = vmatpush1.msra.mxu0 0.0
    %604 = vmatprep.subr.mxu0 0.0
    %605 = vmatpush1.msra.mxu0 0.0
    %606 = vmatprep.subr.mxu0 0.0
    %607 = vmatpush1.msra.mxu0 0.0
    %608 = vmatprep.subr.mxu0 0.0
    %609 = vmatpush1.msra.mxu0 0.0
    %610 = vmatprep.subr.mxu0 0.0
    %611 = vmatpush1.msra.mxu0 0.0
    %612 = vmatprep.subr.mxu0 0.0
    %613 = vmatpush1.msra.mxu0 0.0
    %614 = vmatprep.subr.mxu0 0.0
    %615 = vmatpush1.msra.mxu0 0.0
    %616 = vmatprep.subr.mxu0 0.0
    %617 = vmatpush1.msra.mxu0 0.0
    %618 = vmatprep.subr.mxu0 0.0
    %619 = vmatpush1.msra.mxu0 0.0
    %620 = vmatprep.mubr.f32.mxu0 0.0
    %621 = vmatmul.mubr.f32.gmra.mrb[0].mxu0 %v554
    %v622 = vpop.f32.mrb[0].mxu0
    %v623 = vadd.f32 0.0, %v622
    %v624 = vpop.f32.mrb[0].mxu0
    %625 = vdwg.mxu0
    %v627 = vrot.slane %v623, 4
    %v629 = vadd.f32 %v105, %v627
    %v630 = vxor.u32 %v629, 2147483648
    %v631 = vmul.f32 %v630, 1.442695
    %v632 = vpow.pop %v631
    %v633 = vadd.f32 %v632, 1.0
    %v634 = vrcp.pop %v633
    %v635 = vmul.f32 1.0, %v634
    %v636 = vtanh.pop %v629
    %v638 = vrot.slane %v538, 7
    %v640 = vmul.f32 %v635, %v638
    %642 = vrot.lane.b32.xlu0 %v636, 64
    %v643 = vpop.permute.xlu0 %642
    %v645 = vmul.f32 %v635, %v643
    %647 = vrot.lane.b32.xlu0 %v645, 32
    %v648 = vpop.permute.xlu0 %647
    %v650 = vadd.f32 %v640, %v648
    %v651 = vtanh.pop %v650
    %653 = vrot.lane.b32.xlu0 %v651, 64
    %v654 = vpop.permute.xlu0 %653
    %v656 = vmul.f32 %v635, %v654
    %658 = vrot.lane.b32.xlu0 %v656, 32
    %v659 = vpop.permute.xlu0 %658
    %vm661 = vcmask 258052
    %662 = vst.msk [vmem:[#allocation2] sm:$0x10] %vm661, %v659
    %v663 = vrot.slane %v656, 4
    %664 = vrot.lane.b32.xlu0 %v663, 32
    %v665 = vpop.permute.xlu0 %664
    %v666 = vsel %vm113, %v665, 0
    %668 = vmatprep.subr.mxu0 0.0
    %669 = vmatpush1.msra.mxu0 %v108
    %670 = vmatprep.subr.mxu0 0.0
    %671 = vmatpush1.msra.mxu0 %v109
    %672 = vmatprep.subr.mxu0 0.0
    %673 = vmatpush1.msra.mxu0 %v110
    %674 = vmatprep.subr.mxu0 0.0
    %675 = vmatpush1.msra.mxu0 %v111
    %676 = vmatprep.subr.mxu0 0.0
    %677 = vmatpush1.msra.mxu0 0.0
    %678 = vmatprep.subr.mxu0 0.0
    %679 = vmatpush1.msra.mxu0 0.0
    %680 = vmatprep.subr.mxu0 0.0
    %681 = vmatpush1.msra.mxu0 0.0
    %682 = vmatprep.subr.mxu0 0.0
    %683 = vmatpush1.msra.mxu0 0.0
    %684 = vmatprep.subr.mxu0 0.0
    %685 = vmatpush1.msra.mxu0 0.0
    %686 = vmatprep.subr.mxu0 0.0
    %687 = vmatpush1.msra.mxu0 0.0
    %688 = vmatprep.subr.mxu0 0.0
    %689 = vmatpush1.msra.mxu0 0.0
    %690 = vmatprep.subr.mxu0 0.0
    %691 = vmatpush1.msra.mxu0 0.0
    %692 = vmatprep.subr.mxu0 0.0
    %693 = vmatpush1.msra.mxu0 0.0
    %694 = vmatprep.subr.mxu0 0.0
    %695 = vmatpush1.msra.mxu0 0.0
    %696 = vmatprep.subr.mxu0 0.0
    %697 = vmatpush1.msra.mxu0 0.0
    %698 = vmatprep.subr.mxu0 0.0
    %699 = vmatpush1.msra.mxu0 0.0
    %700 = vmatprep.subr.mxu0 0.0
    %701 = vmatpush1.msra.mxu0 0.0
    %702 = vmatprep.subr.mxu0 0.0
    %703 = vmatpush1.msra.mxu0 0.0
    %704 = vmatprep.subr.mxu0 0.0
    %705 = vmatpush1.msra.mxu0 0.0
    %706 = vmatprep.subr.mxu0 0.0
    %707 = vmatpush1.msra.mxu0 0.0
    %708 = vmatprep.subr.mxu0 0.0
    %709 = vmatpush1.msra.mxu0 0.0
    %710 = vmatprep.subr.mxu0 0.0
    %711 = vmatpush1.msra.mxu0 0.0
    %712 = vmatprep.subr.mxu0 0.0
    %713 = vmatpush1.msra.mxu0 0.0
    %714 = vmatprep.subr.mxu0 0.0
    %715 = vmatpush1.msra.mxu0 0.0
    %716 = vmatprep.subr.mxu0 0.0
    %717 = vmatpush1.msra.mxu0 0.0
    %718 = vmatprep.subr.mxu0 0.0
    %719 = vmatpush1.msra.mxu0 0.0
    %720 = vmatprep.subr.mxu0 0.0
    %721 = vmatpush1.msra.mxu0 0.0
    %722 = vmatprep.subr.mxu0 0.0
    %723 = vmatpush1.msra.mxu0 0.0
    %724 = vmatprep.subr.mxu0 0.0
    %725 = vmatpush1.msra.mxu0 0.0
    %726 = vmatprep.subr.mxu0 0.0
    %727 = vmatpush1.msra.mxu0 0.0
    %728 = vmatprep.subr.mxu0 0.0
    %729 = vmatpush1.msra.mxu0 0.0
    %730 = vmatprep.subr.mxu0 0.0
    %731 = vmatpush1.msra.mxu0 0.0
    %732 = vmatprep.mubr.f32.mxu0 0.0
    %733 = vmatmul.mubr.f32.gmra.mrb[0].mxu0 %v666
    %v734 = vpop.f32.mrb[0].mxu0
    %v735 = vadd.f32 0.0, %v734
    %v736 = vpop.f32.mrb[0].mxu0
    %737 = vdwg.mxu0
    %v739 = vrot.slane %v735, 3
    %v741 = vadd.f32 %v105, %v739
    %v742 = vxor.u32 %v741, 2147483648
    %v743 = vmul.f32 %v742, 1.442695
    %v744 = vpow.pop %v743
    %v745 = vadd.f32 %v744, 1.0
    %v746 = vrcp.pop %v745
    %v747 = vmul.f32 1.0, %v746
    %v748 = vtanh.pop %v741
    %v750 = vrot.slane %v650, 7
    %v752 = vmul.f32 %v747, %v750
    %754 = vrot.lane.b32.xlu0 %v748, 64
    %v755 = vpop.permute.xlu0 %754
    %v757 = vmul.f32 %v747, %v755
    %759 = vrot.lane.b32.xlu0 %v757, 32
    %v760 = vpop.permute.xlu0 %759
    %v762 = vadd.f32 %v752, %v760
    %v763 = vtanh.pop %v762
    %765 = vrot.lane.b32.xlu0 %v763, 64
    %v766 = vpop.permute.xlu0 %765
    %v768 = vmul.f32 %v747, %v766
    %770 = vrot.lane.b32.xlu0 %v768, 32
    %v771 = vpop.permute.xlu0 %770
    %vm773 = vcmask 259077
    %774 = vst.msk [vmem:[#allocation2] sm:$0x20] %vm773, %v771
    %v775 = vrot.slane %v768, 5
    %776 = vrot.lane.b32.xlu0 %v775, 32
    %v777 = vpop.permute.xlu0 %776
    %v778 = vsel %vm113, %v777, 0
    %780 = vmatprep.subr.mxu0 0.0
    %781 = vmatpush1.msra.mxu0 %v108
    %782 = vmatprep.subr.mxu0 0.0
    %783 = vmatpush1.msra.mxu0 %v109
    %784 = vmatprep.subr.mxu0 0.0
    %785 = vmatpush1.msra.mxu0 %v110
    %786 = vmatprep.subr.mxu0 0.0
    %787 = vmatpush1.msra.mxu0 %v111
    %788 = vmatprep.subr.mxu0 0.0
    %789 = vmatpush1.msra.mxu0 0.0
    %790 = vmatprep.subr.mxu0 0.0
    %791 = vmatpush1.msra.mxu0 0.0
    %792 = vmatprep.subr.mxu0 0.0
    %793 = vmatpush1.msra.mxu0 0.0
    %794 = vmatprep.subr.mxu0 0.0
    %795 = vmatpush1.msra.mxu0 0.0
    %796 = vmatprep.subr.mxu0 0.0
    %797 = vmatpush1.msra.mxu0 0.0
    %798 = vmatprep.subr.mxu0 0.0
    %799 = vmatpush1.msra.mxu0 0.0
    %800 = vmatprep.subr.mxu0 0.0
    %801 = vmatpush1.msra.mxu0 0.0
    %802 = vmatprep.subr.mxu0 0.0
    %803 = vmatpush1.msra.mxu0 0.0
    %804 = vmatprep.subr.mxu0 0.0
    %805 = vmatpush1.msra.mxu0 0.0
    %806 = vmatprep.subr.mxu0 0.0
    %807 = vmatpush1.msra.mxu0 0.0
    %808 = vmatprep.subr.mxu0 0.0
    %809 = vmatpush1.msra.mxu0 0.0
    %810 = vmatprep.subr.mxu0 0.0
    %811 = vmatpush1.msra.mxu0 0.0
    %812 = vmatprep.subr.mxu0 0.0
    %813 = vmatpush1.msra.mxu0 0.0
    %814 = vmatprep.subr.mxu0 0.0
    %815 = vmatpush1.msra.mxu0 0.0
    %816 = vmatprep.subr.mxu0 0.0
    %817 = vmatpush1.msra.mxu0 0.0
    %818 = vmatprep.subr.mxu0 0.0
    %819 = vmatpush1.msra.mxu0 0.0
    %820 = vmatprep.subr.mxu0 0.0
    %821 = vmatpush1.msra.mxu0 0.0
    %822 = vmatprep.subr.mxu0 0.0
    %823 = vmatpush1.msra.mxu0 0.0
    %824 = vmatprep.subr.mxu0 0.0
    %825 = vmatpush1.msra.mxu0 0.0
    %826 = vmatprep.subr.mxu0 0.0
    %827 = vmatpush1.msra.mxu0 0.0
    %828 = vmatprep.subr.mxu0 0.0
    %829 = vmatpush1.msra.mxu0 0.0
    %830 = vmatprep.subr.mxu0 0.0
    %831 = vmatpush1.msra.mxu0 0.0
    %832 = vmatprep.subr.mxu0 0.0
    %833 = vmatpush1.msra.mxu0 0.0
    %834 = vmatprep.subr.mxu0 0.0
    %835 = vmatpush1.msra.mxu0 0.0
    %836 = vmatprep.subr.mxu0 0.0
    %837 = vmatpush1.msra.mxu0 0.0
    %838 = vmatprep.subr.mxu0 0.0
    %839 = vmatpush1.msra.mxu0 0.0
    %840 = vmatprep.subr.mxu0 0.0
    %841 = vmatpush1.msra.mxu0 0.0
    %842 = vmatprep.subr.mxu0 0.0
    %843 = vmatpush1.msra.mxu0 0.0
    %844 = vmatprep.mubr.f32.mxu0 0.0
    %845 = vmatmul.mubr.f32.gmra.mrb[0].mxu0 %v778
    %v846 = vpop.f32.mrb[0].mxu0
    %v847 = vadd.f32 0.0, %v846
    %v848 = vpop.f32.mrb[0].mxu0
    %849 = vdwg.mxu0
    %v851 = vrot.slane %v847, 2
    %v853 = vadd.f32 %v105, %v851
    %v854 = vxor.u32 %v853, 2147483648
    %v855 = vmul.f32 %v854, 1.442695
    %v856 = vpow.pop %v855
    %v857 = vadd.f32 %v856, 1.0
    %v858 = vrcp.pop %v857
    %v859 = vmul.f32 1.0, %v858
    %v860 = vtanh.pop %v853
    %v862 = vrot.slane %v762, 7
    %v864 = vmul.f32 %v859, %v862
    %866 = vrot.lane.b32.xlu0 %v860, 64
    %v867 = vpop.permute.xlu0 %866
    %v869 = vmul.f32 %v859, %v867
    %871 = vrot.lane.b32.xlu0 %v869, 32
    %v872 = vpop.permute.xlu0 %871
    %v874 = vadd.f32 %v864, %v872
    %v875 = vtanh.pop %v874
    %877 = vrot.lane.b32.xlu0 %v875, 64
    %v878 = vpop.permute.xlu0 %877
    %v880 = vmul.f32 %v859, %v878
    %882 = vrot.lane.b32.xlu0 %v880, 32
    %v883 = vpop.permute.xlu0 %882
    %vm885 = vcmask 260102
    %886 = vst.msk [vmem:[#allocation2] sm:$0x40] %vm885, %v883
    %v887 = vrot.slane %v880, 6
    %888 = vrot.lane.b32.xlu0 %v887, 32
    %v889 = vpop.permute.xlu0 %888
    %v890 = vsel %vm113, %v889, 0
    %892 = vmatprep.subr.mxu0 0.0
    %893 = vmatpush1.msra.mxu0 %v108
    %894 = vmatprep.subr.mxu0 0.0
    %895 = vmatpush1.msra.mxu0 %v109
    %896 = vmatprep.subr.mxu0 0.0
    %897 = vmatpush1.msra.mxu0 %v110
    %898 = vmatprep.subr.mxu0 0.0
    %899 = vmatpush1.msra.mxu0 %v111
    %900 = vmatprep.subr.mxu0 0.0
    %901 = vmatpush1.msra.mxu0 0.0
    %902 = vmatprep.subr.mxu0 0.0
    %903 = vmatpush1.msra.mxu0 0.0
    %904 = vmatprep.subr.mxu0 0.0
    %905 = vmatpush1.msra.mxu0 0.0
    %906 = vmatprep.subr.mxu0 0.0
    %907 = vmatpush1.msra.mxu0 0.0
    %908 = vmatprep.subr.mxu0 0.0
    %909 = vmatpush1.msra.mxu0 0.0
    %910 = vmatprep.subr.mxu0 0.0
    %911 = vmatpush1.msra.mxu0 0.0
    %912 = vmatprep.subr.mxu0 0.0
    %913 = vmatpush1.msra.mxu0 0.0
    %914 = vmatprep.subr.mxu0 0.0
    %915 = vmatpush1.msra.mxu0 0.0
    %916 = vmatprep.subr.mxu0 0.0
    %917 = vmatpush1.msra.mxu0 0.0
    %918 = vmatprep.subr.mxu0 0.0
    %919 = vmatpush1.msra.mxu0 0.0
    %920 = vmatprep.subr.mxu0 0.0
    %921 = vmatpush1.msra.mxu0 0.0
    %922 = vmatprep.subr.mxu0 0.0
    %923 = vmatpush1.msra.mxu0 0.0
    %924 = vmatprep.subr.mxu0 0.0
    %925 = vmatpush1.msra.mxu0 0.0
    %926 = vmatprep.subr.mxu0 0.0
    %927 = vmatpush1.msra.mxu0 0.0
    %928 = vmatprep.subr.mxu0 0.0
    %929 = vmatpush1.msra.mxu0 0.0
    %930 = vmatprep.subr.mxu0 0.0
    %931 = vmatpush1.msra.mxu0 0.0
    %932 = vmatprep.subr.mxu0 0.0
    %933 = vmatpush1.msra.mxu0 0.0
    %934 = vmatprep.subr.mxu0 0.0
    %935 = vmatpush1.msra.mxu0 0.0
    %936 = vmatprep.subr.mxu0 0.0
    %937 = vmatpush1.msra.mxu0 0.0
    %938 = vmatprep.subr.mxu0 0.0
    %939 = vmatpush1.msra.mxu0 0.0
    %940 = vmatprep.subr.mxu0 0.0
    %941 = vmatpush1.msra.mxu0 0.0
    %942 = vmatprep.subr.mxu0 0.0
    %943 = vmatpush1.msra.mxu0 0.0
    %944 = vmatprep.subr.mxu0 0.0
    %945 = vmatpush1.msra.mxu0 0.0
    %946 = vmatprep.subr.mxu0 0.0
    %947 = vmatpush1.msra.mxu0 0.0
    %948 = vmatprep.subr.mxu0 0.0
    %949 = vmatpush1.msra.mxu0 0.0
    %950 = vmatprep.subr.mxu0 0.0
    %951 = vmatpush1.msra.mxu0 0.0
    %952 = vmatprep.subr.mxu0 0.0
    %953 = vmatpush1.msra.mxu0 0.0
    %954 = vmatprep.subr.mxu0 0.0
    %955 = vmatpush1.msra.mxu0 0.0
    %956 = vmatprep.mubr.f32.mxu0 0.0
    %957 = vmatmul.mubr.f32.gmra.mrb[0].mxu0 %v890
    %v958 = vpop.f32.mrb[0].mxu0
    %v959 = vadd.f32 0.0, %v958
    %v960 = vpop.f32.mrb[0].mxu0
    %961 = vdwg.mxu0
    %v963 = vrot.slane %v959, 1
    %v965 = vadd.f32 %v105, %v963
    %v966 = vxor.u32 %v965, 2147483648
    %v967 = vmul.f32 %v966, 1.442695
    %v968 = vpow.pop %v967
    %v969 = vadd.f32 %v968, 1.0
    %v970 = vrcp.pop %v969
    %v971 = vmul.f32 1.0, %v970
    %v972 = vtanh.pop %v965
    %v974 = vrot.slane %v874, 7
    %v976 = vmul.f32 %v971, %v974
    %978 = vrot.lane.b32.xlu0 %v972, 64
    %v979 = vpop.permute.xlu0 %978
    %v981 = vmul.f32 %v971, %v979
    %983 = vrot.lane.b32.xlu0 %v981, 32
    %v984 = vpop.permute.xlu0 %983
    %v986 = vadd.f32 %v976, %v984
    %v987 = vtanh.pop %v986
    %989 = vrot.lane.b32.xlu0 %v987, 64
    %v990 = vpop.permute.xlu0 %989
    %v992 = vmul.f32 %v971, %v990
    %994 = vrot.lane.b32.xlu0 %v992, 32
    %v995 = vpop.permute.xlu0 %994
    %vm997 = vcmask 261127
    %998 = vst.msk [vmem:[#allocation2] sm:$0x80] %vm997, %v995
    %v999 = vld [vmem:[#allocation2] sm:$0xff]
    %v1000 = vld [vmem:[%s4] sm:$0xff]
    %v1001 = vld [vmem:[%s4 + $0x8] sm:$0xff]
    %v1002 = vld [vmem:[%s4 + $0x10] sm:$0xff]
    %v1003 = vld [vmem:[%s4 + $0x18] sm:$0xff]
    %v1004 = vld [vmem:[%s4 + $0x20] sm:$0xff]
    %v1005 = vld [vmem:[%s4 + $0x28] sm:$0xff]
    %v1006 = vld [vmem:[%s4 + $0x30] sm:$0xff]
    %v1007 = vld [vmem:[%s4 + $0x38] sm:$0xff]
    %v1008 = vld [vmem:[%s4 + $0x40] sm:$0xff]
    %v1009 = vld [vmem:[%s4 + $0x48] sm:$0xff]
    %v1010 = vld [vmem:[%s4 + $0x50] sm:$0xff]
    %v1011 = vld [vmem:[%s4 + $0x58] sm:$0xff]
    %v1012 = vld [vmem:[%s4 + $0x60] sm:$0xff]
    %v1013 = vld [vmem:[%s4 + $0x68] sm:$0xff]
    %v1014 = vld [vmem:[%s4 + $0x70] sm:$0xff]
    %v1015 = vld [vmem:[%s4 + $0x78] sm:$0xff]
    %v1016 = vld [vmem:[%s5] sm:$0x1]
    %v1018 = vlaneseq
    %v1019 = vshrl.u32 %v1018, 7
    %v1020 = vsub.s32 0, %v1019
    %v1021 = vrot.slane %v1016, %v1020
    %1023 = vmatprep.subr.mxu0 0.0
    %1024 = vmatpush1.msra.mxu0 %v1000
    %1025 = vmatprep.subr.mxu0 0.0
    %1026 = vmatpush1.msra.mxu0 %v1001
    %1027 = vmatprep.subr.mxu0 0.0
    %1028 = vmatpush1.msra.mxu0 %v1002
    %1029 = vmatprep.subr.mxu0 0.0
    %1030 = vmatpush1.msra.mxu0 %v1003
    %1031 = vmatprep.subr.mxu0 0.0
    %1032 = vmatpush1.msra.mxu0 %v1004
    %1033 = vmatprep.subr.mxu0 0.0
    %1034 = vmatpush1.msra.mxu0 %v1005
    %1035 = vmatprep.subr.mxu0 0.0
    %1036 = vmatpush1.msra.mxu0 %v1006
    %1037 = vmatprep.subr.mxu0 0.0
    %1038 = vmatpush1.msra.mxu0 %v1007
    %1039 = vmatprep.subr.mxu0 0.0
    %1040 = vmatpush1.msra.mxu0 %v1008
    %1041 = vmatprep.subr.mxu0 0.0
    %1042 = vmatpush1.msra.mxu0 %v1009
    %1043 = vmatprep.subr.mxu0 0.0
    %1044 = vmatpush1.msra.mxu0 %v1010
    %1045 = vmatprep.subr.mxu0 0.0
    %1046 = vmatpush1.msra.mxu0 %v1011
    %1047 = vmatprep.subr.mxu0 0.0
    %1048 = vmatpush1.msra.mxu0 %v1012
    %1049 = vmatprep.subr.mxu0 0.0
    %1050 = vmatpush1.msra.mxu0 %v1013
    %1051 = vmatprep.subr.mxu0 0.0
    %1052 = vmatpush1.msra.mxu0 %v1014
    %1053 = vmatprep.subr.mxu0 0.0
    %1054 = vmatpush1.msra.mxu0 %v1015
    %1055 = vmatprep.subr.mxu0 0.0
    %1056 = vmatpush1.msra.mxu0 0.0
    %1057 = vmatprep.subr.mxu0 0.0
    %1058 = vmatpush1.msra.mxu0 0.0
    %1059 = vmatprep.subr.mxu0 0.0
    %1060 = vmatpush1.msra.mxu0 0.0
    %1061 = vmatprep.subr.mxu0 0.0
    %1062 = vmatpush1.msra.mxu0 0.0
    %1063 = vmatprep.subr.mxu0 0.0
    %1064 = vmatpush1.msra.mxu0 0.0
    %1065 = vmatprep.subr.mxu0 0.0
    %1066 = vmatpush1.msra.mxu0 0.0
    %1067 = vmatprep.subr.mxu0 0.0
    %1068 = vmatpush1.msra.mxu0 0.0
    %1069 = vmatprep.subr.mxu0 0.0
    %1070 = vmatpush1.msra.mxu0 0.0
    %1071 = vmatprep.subr.mxu0 0.0
    %1072 = vmatpush1.msra.mxu0 0.0
    %1073 = vmatprep.subr.mxu0 0.0
    %1074 = vmatpush1.msra.mxu0 0.0
    %1075 = vmatprep.subr.mxu0 0.0
    %1076 = vmatpush1.msra.mxu0 0.0
    %1077 = vmatprep.subr.mxu0 0.0
    %1078 = vmatpush1.msra.mxu0 0.0
    %1079 = vmatprep.subr.mxu0 0.0
    %1080 = vmatpush1.msra.mxu0 0.0
    %1081 = vmatprep.subr.mxu0 0.0
    %1082 = vmatpush1.msra.mxu0 0.0
    %1083 = vmatprep.subr.mxu0 0.0
    %1084 = vmatpush1.msra.mxu0 0.0
    %1085 = vmatprep.subr.mxu0 0.0
    %1086 = vmatpush1.msra.mxu0 0.0
    %1087 = vmatprep.mubr.f32.mxu0 0.0
    %1088 = vmatmul.mubr.f32.gmra.mrb[0].mxu0 %v999
    %v1089 = vpop.f32.mrb[0].mxu0
    %v1090 = vadd.f32 %v1021, %v1089
    %v1091 = vpop.f32.mrb[0].mxu0
    %1092 = vdwg.mxu0
    %1093 = vmax.xlane.f32.xlu0 %v1090
    %v1094 = vpop.xlane.xlu0 %1093
    %v1095 = vsub.f32 %v1090, %v1094
    %v1096 = vmul.f32 %v1095, 1.442695
    %v1097 = vpow.pop %v1096
    %1098 = vadd.xlane.f32.xlu0 %v1097
    %v1099 = vpop.xlane.xlu0 %1098
    %v1100 = vlog2.pop %v1099
    %v1101 = vmul.f32 %v1100, 0.6931472
    %v1102 = vadd.f32 %v1094, %v1101
    %v1103 = vsub.f32 %v1090, %v1102
    %1104 = vst [vmem:[#allocation3] sm:$0xff] %v1103
    // Predicated region
    $region26: #{lstm_ocr_forward.1} parent=1 // pred_check
      _
    $region27: #{lstm_ocr_forward.1} parent=1 // pred_check_branch
      %1106 = sbr.rel (0) target = $region29
    $region28: #{lstm_ocr_forward.1} parent=1 // pred_region
      %s1108 = ssub.s32 128, 128
      %1109 = vsyncadd [#allocation4], %s1108
      %s1111 = sshll.u32 [#allocation3], 4
      %s1112 = int_to_ptr.vmem [resolvable:$true] %s1111
      %1114 = dma.vmem_to_hbm [thread:$0]  %s1112, 128, %s6, [#allocation4]
    $region29: #{lstm_ocr_forward.1} parent=1 // pred_fallthru
      _
    // Predicated region
    $region30: #{lstm_ocr_forward.1} parent=1 // pred_check
      _
    $region31: #{lstm_ocr_forward.1} parent=1 // pred_check_branch
      %1116 = sbr.rel (0) target = $region33
    $region32: #{lstm_ocr_forward.1} parent=1 // pred_region
      %1117 = dma.done [#allocation4], 128
    $region33: #{lstm_ocr_forward.1} parent=1 // pred_fallthru
      _
    %1118 = vsyncpa [#allocation4], 1

</llo_original>
